<compile_context>
chip_gen: v5e
topology: v5e:2x2
jax: 0.10.0
libtpu: 0.0.40
codegen_flags: <defaults>
</compile_context>

<pallas_src>
import functools

import jax
import jax.numpy as jnp
from jax.experimental import pallas as pl
from jax.experimental.pallas import tpu as pltpu

LEAKY_SLOPE = 0.01  # torch.nn.LeakyReLU default negative_slope


def _leaky(x):
    return jnp.where(x >= 0, x, LEAKY_SLOPE * x)


def _tcn_kernel(layer_no, T_no, Tt, nT,
                s_ref, c_ref, w0_ref, b0_ref, *rest):
    """One grid step == one batch element x one time tile (transposed layout).

    rest = [(w_mid, b_mid) * (layer_no-2), w_last, b_last(SMEM), out_ref, syn_ext]
    """
    halo = T_no - 1
    n_mid = layer_no - 2
    mid_refs = rest[:2 * n_mid]
    w_last_ref = rest[2 * n_mid]
    b_last_ref = rest[2 * n_mid + 1]
    out_ref = rest[2 * n_mid + 2]
    syn_ext = rest[2 * n_mid + 3]          # VMEM (sub, halo + Tt) f32

    sub = c_ref.shape[0]
    hid = b0_ref.shape[0]
    t = pl.program_id(1)

    # Fresh batch element: the left halo is the causal zero padding.
    if halo > 0:
        @pl.when(t == 0)
        def _():
            syn_ext[:, :halo] = jnp.zeros((sub, halo), jnp.float32)

    # Synapse -> subunit projection; exp scales and the inhibitory -1 are
    # already folded into c_ref:   syn^T = C_fold @ S^T   -> (sub, Tt), f32.
    syn = jnp.dot(c_ref[...], s_ref[0], preferred_element_type=jnp.float32)
    syn_ext[:, halo:halo + Tt] = syn

    # Layer 0: causal Conv1d(sub, hid, T_no) in accumulation form — T_no small
    # (hid, sub) @ (sub, Tt) MXU pushes over lane-shifted views of syn_ext.
    acc = jnp.zeros((hid, Tt), jnp.float32)
    for k in range(T_no):
        acc += jnp.dot(w0_ref[k], syn_ext[:, k:k + Tt],
                       preferred_element_type=jnp.float32)
    h = _leaky(acc + b0_ref[...])                          # (hid, Tt)

    # Middle layers: Conv1d(hid, hid, 1) == (hid, hid) @ (hid, Tt) + bias.
    for l in range(n_mid):
        w = mid_refs[2 * l][...]                           # (hid_out, hid_in)
        b = mid_refs[2 * l + 1][...]                       # (hid, 1)
        h = _leaky(jnp.dot(w, h, preferred_element_type=jnp.float32) + b)

    # Last layer: Conv1d(hid, 1, 1) -> lane-dense (1, Tt) row written directly.
    res = jnp.dot(w_last_ref[...], h, preferred_element_type=jnp.float32)
    res = res + b_last_ref[0]                              # SMEM scalar bias
    out_ref[...] = res.reshape(1, 1, Tt)

    # Carry the last (T_no - 1) synapse columns into the next time tile.
    if nT > 1 and halo > 0:
        syn_ext[:, :halo] = syn_ext[:, Tt:Tt + halo]


def _pick_time_tile(T, T_no):
    """Largest convenient lane tile: multiples of 256 (MXU width on v6e/v7x)
    preferred, else multiples of 128, capped at 1024; falls back to T."""
    halo = T_no - 1
    for cand in (1024, 768, 512, 256, 896, 640, 384, 128):
        if T % cand == 0 and cand >= halo:
            return cand
    return T


def tcn_forward(S_e, S_i, E_scale, I_scale, conv_params, C_syn_e, C_syn_i,
                T_no, layer_no, time_tile=None, input_dtype=jnp.bfloat16):
    assert layer_no >= 2, "TCN forward requires layer_no >= 2"
    B, T, E = S_e.shape
    I_ = S_i.shape[2]
    sub = C_syn_e.shape[0]
    C_in = E + I_
    w0, b0 = conv_params[0]
    hid = w0.shape[0]
    halo = T_no - 1

    Tt = _pick_time_tile(T, T_no) if time_tile is None else time_tile
    assert T % Tt == 0, "time_tile must divide T"
    nT = T // Tt
    if nT > 1:
        assert Tt % 128 == 0, "tiled time axis needs 128-lane multiples"
        assert Tt >= halo, "time tile must cover the causal halo"

    # ---- one-time folds / re-layouts (plain JAX, outside the kernel) --------
    # exp scales (and the inhibitory -1) folded into one stacked connectivity
    # matrix: a single dot replaces two dots + add.
    c_fold = jnp.concatenate(
        [C_syn_e * jnp.exp(E_scale)[None, :],
         -C_syn_i * jnp.exp(I_scale)[None, :]], axis=1).astype(input_dtype)  # (sub, E+I)

    # One lane-dense input operand: (B, E+I, T), time on lanes, bf16.
    S_t = jnp.transpose(jnp.concatenate([S_e, S_i], axis=-1),
                        (0, 2, 1)).astype(input_dtype)                        # (B, E+I, T)

    in_specs = [
        pl.BlockSpec((1, C_in, Tt), lambda b, t: (b, 0, t)),        # S^T tile
        pl.BlockSpec((sub, C_in), lambda b, t: (0, 0)),             # folded C
        pl.BlockSpec((T_no, hid, sub), lambda b, t: (0, 0, 0)),     # W0 per tap
        pl.BlockSpec((hid, 1), lambda b, t: (0, 0)),                # b0 column
    ]
    weights = [jnp.transpose(w0, (2, 0, 1)).astype(jnp.float32),    # (T_no, hid, sub)
               b0.reshape(hid, 1).astype(jnp.float32)]
    for l in range(1, layer_no - 1):
        w, b = conv_params[l]
        weights += [w[:, :, 0].astype(jnp.float32),                 # (out, in)
                    b.reshape(hid, 1).astype(jnp.float32)]
        in_specs += [pl.BlockSpec((hid, hid), lambda b, t: (0, 0)),
                     pl.BlockSpec((hid, 1), lambda b, t: (0, 0))]
    w_last, b_last = conv_params[layer_no - 1]
    weights += [w_last[:, :, 0].reshape(1, hid).astype(jnp.float32),
                b_last.reshape(1).astype(jnp.float32)]
    in_specs += [pl.BlockSpec((1, hid), lambda b, t: (0, 0)),
                 pl.BlockSpec(memory_space=pltpu.MemorySpace.SMEM)]  # b_last scalar

    out_spec = pl.BlockSpec((1, 1, Tt), lambda b, t: (b, 0, t))      # lane-dense out

    kernel = functools.partial(_tcn_kernel, layer_no, T_no, Tt, nT)
    out = pl.pallas_call(
        kernel,
        out_shape=jax.ShapeDtypeStruct((B, 1, T), jnp.float32),
        grid_spec=pltpu.PrefetchScalarGridSpec(
            num_scalar_prefetch=0,
            grid=(B, nT),                # >= B steps: pipelining + v7x megacore
            in_specs=in_specs,
            out_specs=out_spec,
            scratch_shapes=[pltpu.VMEM((sub, Tt + halo), jnp.float32)],
        ),
        compiler_params=pltpu.CompilerParams(
            dimension_semantics=("parallel", "arbitrary")),
    )(S_t, c_fold, *weights)
    return out[:, 0, :]                                              # (B, T)


def tcn_reference(S_e, S_i, E_scale, I_scale, conv_params, C_syn_e, C_syn_i,
                  T_no, layer_no):
    """Pure-JAX reference with exact PyTorch semantics (for validation)."""
    B, T, _ = S_e.shape
    s_e = S_e * jnp.exp(E_scale)[None, None, :]
    s_i = S_i * jnp.exp(I_scale)[None, None, :] * -1.0
    syn = s_e @ C_syn_e.T + s_i @ C_syn_i.T                  # (B, T, sub)
    sub = syn.shape[2]
    pad = jnp.zeros((B, T + T_no - 1, sub), jnp.float32)
    pad = pad.at[:, T_no - 1:, :].set(syn)
    w0, b0 = conv_params[0]
    hid = w0.shape[0]
    y = jnp.zeros((B, T, hid), jnp.float32)
    for k in range(T_no):
        y = y + jnp.einsum('bts,hs->bth', pad[:, k:k + T, :], w0[:, :, k])
    y = y + b0[None, None, :]
    y = jnp.where(y >= 0, y, LEAKY_SLOPE * y)
    for l in range(1, layer_no - 1):
        w, b = conv_params[l]
        y = jnp.einsum('bth,oh->bto', y, w[:, :, 0]) + b[None, None, :]
        y = jnp.where(y >= 0, y, LEAKY_SLOPE * y)
    w, b = conv_params[layer_no - 1]
    y = jnp.einsum('bth,oh->bto', y, w[:, :, 0]) + b[None, None, :]
    return y[:, :, 0]


if __name__ == "__main__":
    def run_case(name, B, T_data, E_no, I_no, sub_no, T_no, hid_no, layer_no,
                 time_tile=None):
        keys = jax.random.split(jax.random.PRNGKey(0), 16)
        S_e = jax.random.uniform(keys[0], (B, T_data, E_no), jnp.float32)
        S_i = jax.random.uniform(keys[1], (B, T_data, I_no), jnp.float32)
        # Connectivity matrices (module constructor inputs): binary, deterministic.
        C_syn_e = (jax.random.uniform(keys[2], (sub_no, E_no)) > 0.5).astype(jnp.float32)
        C_syn_i = (jax.random.uniform(keys[3], (sub_no, I_no)) > 0.5).astype(jnp.float32)
        # Parameters (shapes from __init__); deterministic synthetic init.
        E_scale = 0.1 * jax.random.normal(keys[4], (E_no,), jnp.float32)
        I_scale = 0.1 * jax.random.normal(keys[5], (I_no,), jnp.float32)
        conv_params = [(0.2 * jax.random.normal(keys[6], (hid_no, sub_no, T_no), jnp.float32),
                        0.1 * jax.random.normal(keys[7], (hid_no,), jnp.float32))]
        ki = 8
        for l in range(1, layer_no - 1):
            conv_params.append(
                (0.2 * jax.random.normal(keys[ki], (hid_no, hid_no, 1), jnp.float32),
                 0.1 * jax.random.normal(keys[ki + 1], (hid_no,), jnp.float32)))
            ki += 2
        conv_params.append(
            (0.2 * jax.random.normal(keys[ki], (1, hid_no, 1), jnp.float32),
             0.1 * jax.random.normal(keys[ki + 1], (1,), jnp.float32)))
        # TODO(synk): V_o parameter is declared in __init__ but never used in forward(); omitted.

        out = tcn_forward(S_e, S_i, E_scale, I_scale, conv_params,
                          C_syn_e, C_syn_i, T_no, layer_no, time_tile=time_tile)
        out = jax.block_until_ready(out)

        ref = tcn_reference(S_e, S_i, E_scale, I_scale, conv_params,
                            C_syn_e, C_syn_i, T_no, layer_no)
        assert out.shape == (B, T_data), (name, out.shape)
        # bf16 input quantization => ~0.5% relative error budget.
        assert jnp.allclose(out, ref, atol=2e-2, rtol=2e-2), (name, out, ref)

    # Small case from the module spec (single time tile).
    run_case("small", B=2, T_data=16, E_no=8, I_no=6, sub_no=4,
             T_no=4, hid_no=8, layer_no=3)
    # Time-tiled case: two 128-lane tiles, exercises the causal-halo carry.
    run_case("tiled", B=2, T_data=256, E_no=8, I_no=6, sub_no=4,
             T_no=4, hid_no=8, layer_no=3, time_tile=128)
    print("KERNEL_OK")
</pallas_src>

<mosaic_0001>
module attributes {stable_mosaic.version = 11 : i64} {
  func.func @_tcn_kernel(%arg0: i32, %arg1: i32, %arg2: memref<1x14x16xbf16, #tpu.memory_space<vmem>>, %arg3: memref<4x14xbf16, #tpu.memory_space<vmem>>, %arg4: memref<4x8x4xf32, #tpu.memory_space<vmem>>, %arg5: memref<8x1xf32, #tpu.memory_space<vmem>>, %arg6: memref<8x8xf32, #tpu.memory_space<vmem>>, %arg7: memref<8x1xf32, #tpu.memory_space<vmem>>, %arg8: memref<1x8xf32, #tpu.memory_space<vmem>>, %arg9: memref<1xf32, #tpu.memory_space<smem>>, %arg10: memref<1x1x16xf32, #tpu.memory_space<vmem>>, %arg11: memref<4x19xf32, #tpu.memory_space<vmem>>) attributes {dimension_semantics = [#tpu.dimension_semantics<parallel>, #tpu.dimension_semantics<arbitrary>], iteration_bounds = array<i64: 2, 1>, scalar_prefetch = 0 : i64, scratch_operands = 1 : i64, tpu.core_type = #tpu.core_type<tc>, window_params = [{transform_indices = @transform_0, window_bounds = array<i64: 1, 14, 16>}, {pipeline_mode = #tpu.pipeline_mode<synchronous>, transform_indices = @transform_1, window_bounds = array<i64: 4, 14>}, {pipeline_mode = #tpu.pipeline_mode<synchronous>, transform_indices = @transform_2, window_bounds = array<i64: 4, 8, 4>}, {pipeline_mode = #tpu.pipeline_mode<synchronous>, transform_indices = @transform_3, window_bounds = array<i64: 8, 1>}, {pipeline_mode = #tpu.pipeline_mode<synchronous>, transform_indices = @transform_4, window_bounds = array<i64: 8, 8>}, {pipeline_mode = #tpu.pipeline_mode<synchronous>, transform_indices = @transform_5, window_bounds = array<i64: 8, 1>}, {pipeline_mode = #tpu.pipeline_mode<synchronous>, transform_indices = @transform_6, window_bounds = array<i64: 1, 8>}, {transform_indices = @transform_7, window_bounds = array<i64: 1>}, {transform_indices = @transform_8, window_bounds = array<i64: 1, 1, 16>}]} {
    %c0_i32 = arith.constant 0 : i32
    %0 = arith.cmpi eq, %arg1, %c0_i32 : i32
    %1 = arith.extui %0 : i1 to i32
    %c0_i32_0 = arith.constant 0 : i32
    %2 = arith.cmpi ne, %1, %c0_i32_0 : i32
    scf.if %2 {
      %cst_47 = arith.constant 0.000000e+00 : f32
      %54 = vector.broadcast %cst_47 : f32 to vector<4x3xf32>
      %c0_48 = arith.constant 0 : index
      %c0_49 = arith.constant 0 : index
      %55 = vector.load %arg11[%c0_48, %c0_49] : memref<4x19xf32, #tpu.memory_space<vmem>>, vector<4x3xf32>
      tpu.vector_store %arg11[%c0_48, %c0_49], %54 {strides = array<i32>} : memref<4x19xf32, #tpu.memory_space<vmem>>, vector<4x3xf32>,
    } else {
    }
    %c0 = arith.constant 0 : index
    %c0_1 = arith.constant 0 : index
    %3 = vector.load %arg3[%c0, %c0_1] : memref<4x14xbf16, #tpu.memory_space<vmem>>, vector<4x14xbf16>
    %c0_2 = arith.constant 0 : index
    %c0_3 = arith.constant 0 : index
    %c0_4 = arith.constant 0 : index
    %4 = vector.load %arg2[%c0_2, %c0_3, %c0_4] : memref<1x14x16xbf16, #tpu.memory_space<vmem>>, vector<1x14x16xbf16>
    %5 = vector.shape_cast %4 : vector<1x14x16xbf16> to vector<14x16xbf16>
    %cst = arith.constant dense<0.000000e+00> : vector<4x16xf32>
    %6 = tpu.matmul %3, %5, %cst {dimension_numbers = #tpu.dot_dimension_numbers<[1], [0], [0], [1], [0, 0, 1, 1], [], []>} : vector<4x14xbf16>, vector<14x16xbf16>, vector<4x16xf32> -> vector<4x16xf32>
    %c0_5 = arith.constant 0 : index
    %c3 = arith.constant 3 : index
    %7 = vector.load %arg11[%c0_5, %c3] : memref<4x19xf32, #tpu.memory_space<vmem>>, vector<4x16xf32>
    tpu.vector_store %arg11[%c0_5, %c3], %6 {strides = array<i32>} : memref<4x19xf32, #tpu.memory_space<vmem>>, vector<4x16xf32>,
    %cst_6 = arith.constant 0.000000e+00 : f32
    %8 = vector.broadcast %cst_6 : f32 to vector<8x16xf32>
    %c0_7 = arith.constant 0 : index
    %c0_8 = arith.constant 0 : index
    %c0_9 = arith.constant 0 : index
    %9 = vector.load %arg4[%c0_7, %c0_8, %c0_9] : memref<4x8x4xf32, #tpu.memory_space<vmem>>, vector<1x8x4xf32>
    %10 = vector.shape_cast %9 : vector<1x8x4xf32> to vector<8x4xf32>
    %c0_10 = arith.constant 0 : index
    %c0_11 = arith.constant 0 : index
    %11 = vector.load %arg11[%c0_10, %c0_11] : memref<4x19xf32, #tpu.memory_space<vmem>>, vector<4x16xf32>
    %cst_12 = arith.constant dense<0.000000e+00> : vector<8x16xf32>
    %12 = tpu.matmul %10, %11, %cst_12 {dimension_numbers = #tpu.dot_dimension_numbers<[1], [0], [0], [1], [0, 0, 1, 1], [], []>} : vector<8x4xf32>, vector<4x16xf32>, vector<8x16xf32> -> vector<8x16xf32>
    %13 = arith.addf %8, %12 : vector<8x16xf32>
    %c1 = arith.constant 1 : index
    %c0_13 = arith.constant 0 : index
    %c0_14 = arith.constant 0 : index
    %14 = vector.load %arg4[%c1, %c0_13, %c0_14] : memref<4x8x4xf32, #tpu.memory_space<vmem>>, vector<1x8x4xf32>
    %15 = vector.shape_cast %14 : vector<1x8x4xf32> to vector<8x4xf32>
    %c0_15 = arith.constant 0 : index
    %c1_16 = arith.constant 1 : index
    %16 = vector.load %arg11[%c0_15, %c1_16] : memref<4x19xf32, #tpu.memory_space<vmem>>, vector<4x16xf32>
    %cst_17 = arith.constant dense<0.000000e+00> : vector<8x16xf32>
    %17 = tpu.matmul %15, %16, %cst_17 {dimension_numbers = #tpu.dot_dimension_numbers<[1], [0], [0], [1], [0, 0, 1, 1], [], []>} : vector<8x4xf32>, vector<4x16xf32>, vector<8x16xf32> -> vector<8x16xf32>
    %18 = arith.addf %13, %17 : vector<8x16xf32>
    %c2 = arith.constant 2 : index
    %c0_18 = arith.constant 0 : index
    %c0_19 = arith.constant 0 : index
    %19 = vector.load %arg4[%c2, %c0_18, %c0_19] : memref<4x8x4xf32, #tpu.memory_space<vmem>>, vector<1x8x4xf32>
    %20 = vector.shape_cast %19 : vector<1x8x4xf32> to vector<8x4xf32>
    %c0_20 = arith.constant 0 : index
    %c2_21 = arith.constant 2 : index
    %21 = vector.load %arg11[%c0_20, %c2_21] : memref<4x19xf32, #tpu.memory_space<vmem>>, vector<4x16xf32>
    %cst_22 = arith.constant dense<0.000000e+00> : vector<8x16xf32>
    %22 = tpu.matmul %20, %21, %cst_22 {dimension_numbers = #tpu.dot_dimension_numbers<[1], [0], [0], [1], [0, 0, 1, 1], [], []>} : vector<8x4xf32>, vector<4x16xf32>, vector<8x16xf32> -> vector<8x16xf32>
    %23 = arith.addf %18, %22 : vector<8x16xf32>
    %c3_23 = arith.constant 3 : index
    %c0_24 = arith.constant 0 : index
    %c0_25 = arith.constant 0 : index
    %24 = vector.load %arg4[%c3_23, %c0_24, %c0_25] : memref<4x8x4xf32, #tpu.memory_space<vmem>>, vector<1x8x4xf32>
    %25 = vector.shape_cast %24 : vector<1x8x4xf32> to vector<8x4xf32>
    %c0_26 = arith.constant 0 : index
    %c3_27 = arith.constant 3 : index
    %26 = vector.load %arg11[%c0_26, %c3_27] : memref<4x19xf32, #tpu.memory_space<vmem>>, vector<4x16xf32>
    %cst_28 = arith.constant dense<0.000000e+00> : vector<8x16xf32>
    %27 = tpu.matmul %25, %26, %cst_28 {dimension_numbers = #tpu.dot_dimension_numbers<[1], [0], [0], [1], [0, 0, 1, 1], [], []>} : vector<8x4xf32>, vector<4x16xf32>, vector<8x16xf32> -> vector<8x16xf32>
    %28 = arith.addf %23, %27 : vector<8x16xf32>
    %c0_29 = arith.constant 0 : index
    %c0_30 = arith.constant 0 : index
    %29 = vector.load %arg5[%c0_29, %c0_30] : memref<8x1xf32, #tpu.memory_space<vmem>>, vector<8x1xf32>
    %30 = vector.broadcast %29 : vector<8x1xf32> to vector<8x16xf32>
    %31 = arith.addf %28, %30 : vector<8x16xf32>
    %cst_31 = arith.constant 0.000000e+00 : f32
    %32 = vector.broadcast %cst_31 : f32 to vector<8x16xf32>
    %33 = arith.cmpf oge, %31, %32 : vector<8x16xf32>
    %cst_32 = arith.constant 0.00999999977 : f32
    %34 = vector.broadcast %cst_32 : f32 to vector<8x16xf32>
    %35 = arith.mulf %34, %31 : vector<8x16xf32>
    %36 = arith.select %33, %31, %35 : vector<8x16xi1>, vector<8x16xf32>
    %c0_33 = arith.constant 0 : index
    %c0_34 = arith.constant 0 : index
    %37 = vector.load %arg6[%c0_33, %c0_34] : memref<8x8xf32, #tpu.memory_space<vmem>>, vector<8x8xf32>
    %c0_35 = arith.constant 0 : index
    %c0_36 = arith.constant 0 : index
    %38 = vector.load %arg7[%c0_35, %c0_36] : memref<8x1xf32, #tpu.memory_space<vmem>>, vector<8x1xf32>
    %cst_37 = arith.constant dense<0.000000e+00> : vector<8x16xf32>
    %39 = tpu.matmul %37, %36, %cst_37 {dimension_numbers = #tpu.dot_dimension_numbers<[1], [0], [0], [1], [0, 0, 1, 1], [], []>} : vector<8x8xf32>, vector<8x16xf32>, vector<8x16xf32> -> vector<8x16xf32>
    %40 = vector.broadcast %38 : vector<8x1xf32> to vector<8x16xf32>
    %41 = arith.addf %39, %40 : vector<8x16xf32>
    %cst_38 = arith.constant 0.000000e+00 : f32
    %42 = vector.broadcast %cst_38 : f32 to vector<8x16xf32>
    %43 = arith.cmpf oge, %41, %42 : vector<8x16xf32>
    %cst_39 = arith.constant 0.00999999977 : f32
    %44 = vector.broadcast %cst_39 : f32 to vector<8x16xf32>
    %45 = arith.mulf %44, %41 : vector<8x16xf32>
    %46 = arith.select %43, %41, %45 : vector<8x16xi1>, vector<8x16xf32>
    %c0_40 = arith.constant 0 : index
    %c0_41 = arith.constant 0 : index
    %47 = vector.load %arg8[%c0_40, %c0_41] : memref<1x8xf32, #tpu.memory_space<vmem>>, vector<1x8xf32>
    %cst_42 = arith.constant dense<0.000000e+00> : vector<1x16xf32>
    %48 = tpu.matmul %47, %46, %cst_42 {dimension_numbers = #tpu.dot_dimension_numbers<[1], [0], [0], [1], [0, 0, 1, 1], [], []>} : vector<1x8xf32>, vector<8x16xf32>, vector<1x16xf32> -> vector<1x16xf32>
    %c0_43 = arith.constant 0 : index
    %49 = memref.load %arg9[%c0_43] : memref<1xf32, #tpu.memory_space<smem>>
    %50 = vector.broadcast %49 : f32 to vector<1x16xf32>
    %51 = arith.addf %48, %50 : vector<1x16xf32>
    %52 = vector.shape_cast %51 : vector<1x16xf32> to vector<1x1x16xf32>
    %c0_44 = arith.constant 0 : index
    %c0_45 = arith.constant 0 : index
    %c0_46 = arith.constant 0 : index
    %53 = vector.load %arg10[%c0_44, %c0_45, %c0_46] : memref<1x1x16xf32, #tpu.memory_space<vmem>>, vector<1x1x16xf32>
    tpu.vector_store %arg10[%c0_44, %c0_45, %c0_46], %52 {strides = array<i32>} : memref<1x1x16xf32, #tpu.memory_space<vmem>>, vector<1x1x16xf32>,
    return
  }
  func.func @transform_0(%arg0: i32, %arg1: i32) -> (i32, i32, i32) {
    %c0_i32 = arith.constant 0 : i32
    %c0_i32_0 = arith.constant 0 : i32
    return %arg0, %c0_i32, %arg1 : i32, i32, i32
  }
  func.func @transform_1(%arg0: i32, %arg1: i32) -> (i32, i32) {
    %c0_i32 = arith.constant 0 : i32
    %c0_i32_0 = arith.constant 0 : i32
    %c0_i32_1 = arith.constant 0 : i32
    return %c0_i32, %c0_i32_0 : i32, i32
  }
  func.func @transform_2(%arg0: i32, %arg1: i32) -> (i32, i32, i32) {
    %c0_i32 = arith.constant 0 : i32
    %c0_i32_0 = arith.constant 0 : i32
    %c0_i32_1 = arith.constant 0 : i32
    %c0_i32_2 = arith.constant 0 : i32
    return %c0_i32, %c0_i32_0, %c0_i32_1 : i32, i32, i32
  }
  func.func @transform_3(%arg0: i32, %arg1: i32) -> (i32, i32) {
    %c0_i32 = arith.constant 0 : i32
    %c0_i32_0 = arith.constant 0 : i32
    %c0_i32_1 = arith.constant 0 : i32
    return %c0_i32, %c0_i32_0 : i32, i32
  }
  func.func @transform_4(%arg0: i32, %arg1: i32) -> (i32, i32) {
    %c0_i32 = arith.constant 0 : i32
    %c0_i32_0 = arith.constant 0 : i32
    %c0_i32_1 = arith.constant 0 : i32
    return %c0_i32, %c0_i32_0 : i32, i32
  }
  func.func @transform_5(%arg0: i32, %arg1: i32) -> (i32, i32) {
    %c0_i32 = arith.constant 0 : i32
    %c0_i32_0 = arith.constant 0 : i32
    %c0_i32_1 = arith.constant 0 : i32
    return %c0_i32, %c0_i32_0 : i32, i32
  }
  func.func @transform_6(%arg0: i32, %arg1: i32) -> (i32, i32) {
    %c0_i32 = arith.constant 0 : i32
    %c0_i32_0 = arith.constant 0 : i32
    %c0_i32_1 = arith.constant 0 : i32
    return %c0_i32, %c0_i32_0 : i32, i32
  }
  func.func @transform_7(%arg0: i32, %arg1: i32) -> i32 {
    %c0_i32 = arith.constant 0 : i32
    %c0_i32_0 = arith.constant 0 : i32
    return %c0_i32 : i32
  }
  func.func @transform_8(%arg0: i32, %arg1: i32) -> (i32, i32, i32) {
    %c0_i32 = arith.constant 0 : i32
    %c0_i32_0 = arith.constant 0 : i32
    return %arg0, %c0_i32, %arg1 : i32, i32, i32
  }
}

</mosaic_0001>

<llo_original>
// kernel: tpu_custom_call.1
$region0: #{tpu_custom_call.1}
  #allocation0 [shape = 'u32[]', space=smem, size = 0x4, offset = 0x4, fixed_abs, tag = 'smem constant byte address 0x4 - core index']
  #allocation1 [shape = 'u32[72,128]{1,0:T(1,128)}', space=vmem, size = 0x9000, scoped, tag = 'internal scratch']
  #allocation2 [shape = 'f32[4,19]{1,0:T(4,128)}', space=vmem, size = 0x800, scoped, tag = 'scratch operand']
  #allocation3 [shape = 'f32[1]{0:T(128)S(6)}', space=smem, size = 0x200, scoped, tag = 'scoped memory for tpu_custom_call.1']
  %s0 = inlined_call_operand.vmem [shape: bf16[2,14,16], index: 0, kind: input, shape index: {}]
  %s1 = inlined_call_operand.vmem [shape: bf16[4,14], index: 1, kind: input, shape index: {}]
  %s2 = inlined_call_operand.vmem [shape: f32[4,8,4], index: 2, kind: input, shape index: {}]
  %s3 = inlined_call_operand.vmem [shape: f32[8,1], index: 3, kind: input, shape index: {}]
  %s4 = inlined_call_operand.vmem [shape: f32[8,8], index: 4, kind: input, shape index: {}]
  %s5 = inlined_call_operand.vmem [shape: f32[8,1], index: 5, kind: input, shape index: {}]
  %s6 = inlined_call_operand.vmem [shape: f32[1,8], index: 6, kind: input, shape index: {}]
  %s7 = inlined_call_operand.<no memory space> [shape: f32[1], index: 7, kind: input, shape index: {}]
  %s8 = inlined_call_operand.hbm [shape: f32[2,1,16], index: 8, kind: output, shape index: {}]
  %s9 = sld [smem:[#allocation0]]
  $region69: #{tpu_custom_call.1} parent=0
    _
  %s11 = ssub.s32 1, %s9
  %s12 = scalar_select 0, %s11, %s9
  %13 = sst [smem:[#allocation3]] %s7
  $region1: #{tpu_custom_call.1} parent=0
    #allocation4 [shape = 'u8[1024]{0}', space=vmem, size = 0x400, scoped, tag = 'output window, operand 0']
    #allocation5 [shape = 's32[2]{0}', space=sflag, size = 0x8, scoped, tag = 'scoped memory for tpu_custom_call.1']
    %14 = vsyncpa [#allocation5], 0
    %s15 = scalar_lea.sflag [#allocation5], 1
    %16 = vsyncpa %s15, 0
    loop: start=0, step=1, limit=4
    $region2: #{tpu_custom_call.1} parent=1 // loop_pre_header
      _
    $region3: #{tpu_custom_call.1} parent=1 // loop_header
      %s18 = sphi 0, %s22
      %p19 = scmp.ge.s32.totalorder %s18, 4
      %s25 = sphi 0, %s37
      %s26 = sphi 0, %s33
      %s27 = sphi 0, %s25
      %s28 = sphi 0, %s26
      %s29 = sphi 0, %s27
      %s30 = sphi 0, %s28
      %s42 = sphi 0, %s44
      %s45 = sphi 0, %s42
      %s46 = sphi 0, %s45
      %s62 = sphi 0, %s46
      %s66 = sphi 0, %s66
      %s68 = sphi 0, %s66
      %s69 = sphi 0, %s68
      %s83 = sphi 0, %s69
      %s87 = sphi 0, %s87
      %s89 = sphi 0, %s87
      %s90 = sphi 0, %s89
      %s104 = sphi 0, %s90
      %s108 = sphi 0, %s108
      %s110 = sphi 0, %s108
      %s111 = sphi 0, %s110
      %s125 = sphi 0, %s111
      %s129 = sphi 0, %s129
      %s131 = sphi 0, %s129
      %s132 = sphi 0, %s131
      %s146 = sphi 0, %s132
      %s150 = sphi 0, %s150
      %s152 = sphi 0, %s150
      %s153 = sphi 0, %s152
      %s167 = sphi 0, %s153
      %s171 = sphi 0, %s171
      %s173 = sphi 0, %s171
      %s174 = sphi 0, %s173
      %s188 = sphi 0, %s174
      %s192 = sphi 0, %s192
      %s194 = sphi 0, %s192
      %s195 = sphi 0, %s194
      %s209 = sphi 0, %s195
      %s217 = sphi 0, %s219
      %s220 = sphi 0, %s217
      %s221 = sphi 0, %s220
      %s237 = sphi 0, %s221
    $region4: #{tpu_custom_call.1} parent=1 // loop_header_branch
      %21 = sbr.rel (%p19) target = $region8
    $region5: #{tpu_custom_call.1} parent=1 // loop_body
      %s23 = ssub.s32 %s18, 1
      %s24 = ssub.s32 %s18, 2
      %s31 = sadd.s32 1, %s26
      %p32 = scmp.ge.s32.totalorder %s31, 1
      %s33 = scalar_select %p32, 0, %s31
      %s34 = sadd.s32 1, %s25
      %s35 = scalar_select %p32, %s34, %s25
      %p36 = scmp.ge.s32.totalorder %s35, 2
      %s37 = scalar_select %p36, 0, %s35
      %s38 = ssub.s32 %s25, %s37
      %s39 = ssub.s32 %s26, %s33
      %s40 = sor.u32 %s38, %s39
      %p41 = scmp.eq.s32.totalorder %s40, 0
      %s43 = sadd.s32 %s42, 1
      %s44 = scalar_select %p41, %s42, %s43
      %p47 = pneg %p41
      %p48 = scmp.eq.s32.totalorder %s18, 1
      %p49 = por %p47, %p48
      %p50 = scmp.ne.s32.totalorder %s42, %s45
      %p51 = scmp.eq.s32.totalorder %s18, 0
      %p52 = por %p50, %p51
      %p53 = scmp.ne.s32.totalorder %s42, %s45
      %p54 = scmp.eq.s32.totalorder %s23, 1
      %p55 = por %p53, %p54
      %p56 = scmp.ne.s32.totalorder %s45, %s46
      %p57 = scmp.eq.s32.totalorder %s23, 0
      %p58 = por %p56, %p57
      %p59 = scmp.ne.s32.totalorder %s45, %s46
      %p60 = scmp.eq.s32.totalorder %s24, 1
      %p61 = por %p59, %p60
      %p63 = scmp.ne.s32.totalorder %s46, %s62
      %p64 = scmp.eq.s32.totalorder %s24, 0
      %p65 = por %p63, %p64
      %s67 = sadd.s32 %s66, 1
      %p70 = scmp.eq.s32.totalorder %s18, 1
      %p71 = scmp.ne.s32.totalorder %s66, %s68
      %p72 = scmp.eq.s32.totalorder %s18, 0
      %p73 = por %p71, %p72
      %p74 = scmp.ne.s32.totalorder %s66, %s68
      %p75 = scmp.eq.s32.totalorder %s23, 1
      %p76 = por %p74, %p75
      %p77 = scmp.ne.s32.totalorder %s68, %s69
      %p78 = scmp.eq.s32.totalorder %s23, 0
      %p79 = por %p77, %p78
      %p80 = scmp.ne.s32.totalorder %s68, %s69
      %p81 = scmp.eq.s32.totalorder %s24, 1
      %p82 = por %p80, %p81
      %p84 = scmp.ne.s32.totalorder %s69, %s83
      %p85 = scmp.eq.s32.totalorder %s24, 0
      %p86 = por %p84, %p85
      %s88 = sadd.s32 %s87, 1
      %p91 = scmp.eq.s32.totalorder %s18, 1
      %p92 = scmp.ne.s32.totalorder %s87, %s89
      %p93 = scmp.eq.s32.totalorder %s18, 0
      %p94 = por %p92, %p93
      %p95 = scmp.ne.s32.totalorder %s87, %s89
      %p96 = scmp.eq.s32.totalorder %s23, 1
      %p97 = por %p95, %p96
      %p98 = scmp.ne.s32.totalorder %s89, %s90
      %p99 = scmp.eq.s32.totalorder %s23, 0
      %p100 = por %p98, %p99
      %p101 = scmp.ne.s32.totalorder %s89, %s90
      %p102 = scmp.eq.s32.totalorder %s24, 1
      %p103 = por %p101, %p102
      %p105 = scmp.ne.s32.totalorder %s90, %s104
      %p106 = scmp.eq.s32.totalorder %s24, 0
      %p107 = por %p105, %p106
      %s109 = sadd.s32 %s108, 1
      %p112 = scmp.eq.s32.totalorder %s18, 1
      %p113 = scmp.ne.s32.totalorder %s108, %s110
      %p114 = scmp.eq.s32.totalorder %s18, 0
      %p115 = por %p113, %p114
      %p116 = scmp.ne.s32.totalorder %s108, %s110
      %p117 = scmp.eq.s32.totalorder %s23, 1
      %p118 = por %p116, %p117
      %p119 = scmp.ne.s32.totalorder %s110, %s111
      %p120 = scmp.eq.s32.totalorder %s23, 0
      %p121 = por %p119, %p120
      %p122 = scmp.ne.s32.totalorder %s110, %s111
      %p123 = scmp.eq.s32.totalorder %s24, 1
      %p124 = por %p122, %p123
      %p126 = scmp.ne.s32.totalorder %s111, %s125
      %p127 = scmp.eq.s32.totalorder %s24, 0
      %p128 = por %p126, %p127
      %s130 = sadd.s32 %s129, 1
      %p133 = scmp.eq.s32.totalorder %s18, 1
      %p134 = scmp.ne.s32.totalorder %s129, %s131
      %p135 = scmp.eq.s32.totalorder %s18, 0
      %p136 = por %p134, %p135
      %p137 = scmp.ne.s32.totalorder %s129, %s131
      %p138 = scmp.eq.s32.totalorder %s23, 1
      %p139 = por %p137, %p138
      %p140 = scmp.ne.s32.totalorder %s131, %s132
      %p141 = scmp.eq.s32.totalorder %s23, 0
      %p142 = por %p140, %p141
      %p143 = scmp.ne.s32.totalorder %s131, %s132
      %p144 = scmp.eq.s32.totalorder %s24, 1
      %p145 = por %p143, %p144
      %p147 = scmp.ne.s32.totalorder %s132, %s146
      %p148 = scmp.eq.s32.totalorder %s24, 0
      %p149 = por %p147, %p148
      %s151 = sadd.s32 %s150, 1
      %p154 = scmp.eq.s32.totalorder %s18, 1
      %p155 = scmp.ne.s32.totalorder %s150, %s152
      %p156 = scmp.eq.s32.totalorder %s18, 0
      %p157 = por %p155, %p156
      %p158 = scmp.ne.s32.totalorder %s150, %s152
      %p159 = scmp.eq.s32.totalorder %s23, 1
      %p160 = por %p158, %p159
      %p161 = scmp.ne.s32.totalorder %s152, %s153
      %p162 = scmp.eq.s32.totalorder %s23, 0
      %p163 = por %p161, %p162
      %p164 = scmp.ne.s32.totalorder %s152, %s153
      %p165 = scmp.eq.s32.totalorder %s24, 1
      %p166 = por %p164, %p165
      %p168 = scmp.ne.s32.totalorder %s153, %s167
      %p169 = scmp.eq.s32.totalorder %s24, 0
      %p170 = por %p168, %p169
      %s172 = sadd.s32 %s171, 1
      %p175 = scmp.eq.s32.totalorder %s18, 1
      %p176 = scmp.ne.s32.totalorder %s171, %s173
      %p177 = scmp.eq.s32.totalorder %s18, 0
      %p178 = por %p176, %p177
      %p179 = scmp.ne.s32.totalorder %s171, %s173
      %p180 = scmp.eq.s32.totalorder %s23, 1
      %p181 = por %p179, %p180
      %p182 = scmp.ne.s32.totalorder %s173, %s174
      %p183 = scmp.eq.s32.totalorder %s23, 0
      %p184 = por %p182, %p183
      %p185 = scmp.ne.s32.totalorder %s173, %s174
      %p186 = scmp.eq.s32.totalorder %s24, 1
      %p187 = por %p185, %p186
      %p189 = scmp.ne.s32.totalorder %s174, %s188
      %p190 = scmp.eq.s32.totalorder %s24, 0
      %p191 = por %p189, %p190
      %s193 = sadd.s32 %s192, 1
      %p196 = scmp.eq.s32.totalorder %s18, 1
      %p197 = scmp.ne.s32.totalorder %s192, %s194
      %p198 = scmp.eq.s32.totalorder %s18, 0
      %p199 = por %p197, %p198
      %p200 = scmp.ne.s32.totalorder %s192, %s194
      %p201 = scmp.eq.s32.totalorder %s23, 1
      %p202 = por %p200, %p201
      %p203 = scmp.ne.s32.totalorder %s194, %s195
      %p204 = scmp.eq.s32.totalorder %s23, 0
      %p205 = por %p203, %p204
      %p206 = scmp.ne.s32.totalorder %s194, %s195
      %p207 = scmp.eq.s32.totalorder %s24, 1
      %p208 = por %p206, %p207
      %p210 = scmp.ne.s32.totalorder %s195, %s209
      %p211 = scmp.eq.s32.totalorder %s24, 0
      %p212 = por %p210, %p211
      %s213 = ssub.s32 %s25, %s37
      %s214 = ssub.s32 %s26, %s33
      %s215 = sor.u32 %s213, %s214
      %p216 = scmp.eq.s32.totalorder %s215, 0
      %s218 = sadd.s32 %s217, 1
      %s219 = scalar_select %p216, %s217, %s218
      %p222 = pneg %p216
      %p223 = scmp.eq.s32.totalorder %s18, 1
      %p224 = por %p222, %p223
      %p225 = scmp.ne.s32.totalorder %s217, %s220
      %p226 = scmp.eq.s32.totalorder %s18, 0
      %p227 = por %p225, %p226
      %p228 = scmp.ne.s32.totalorder %s217, %s220
      %p229 = scmp.eq.s32.totalorder %s23, 1
      %p230 = por %p228, %p229
      %p231 = scmp.ne.s32.totalorder %s220, %s221
      %p232 = scmp.eq.s32.totalorder %s23, 0
      %p233 = por %p231, %p232
      %p234 = scmp.ne.s32.totalorder %s220, %s221
      %p235 = scmp.eq.s32.totalorder %s24, 1
      %p236 = por %p234, %p235
      %p238 = scmp.ne.s32.totalorder %s221, %s237
      %p239 = scmp.eq.s32.totalorder %s24, 0
      %p240 = por %p238, %p239
      %p241 = scmp.le.s32.totalorder 1, %s18
      %p242 = scmp.lt.s32.totalorder %s18, 3
      %p243 = pnand %p241, %p242
      %p244 = pneg %p243
      // Predicated region
      $region9: #{tpu_custom_call.1} parent=5 // pred_check
        _
      $region10: #{tpu_custom_call.1} parent=5 // pred_check_branch
        %246 = sbr.rel (%p243) target = $region12
      $region11: #{tpu_custom_call.1} parent=5 // pred_region
        %s247 = ssub.s32 %s18, 1
        // Predicated region
        $region13: #{tpu_custom_call.1} parent=11 // pred_check
          %p248 = pneg %p79
        $region14: #{tpu_custom_call.1} parent=11 // pred_check_branch
          %250 = sbr.rel (%p248) target = $region16
        $region15: #{tpu_custom_call.1} parent=11 // pred_region
          _
        $region16: #{tpu_custom_call.1} parent=11 // pred_fallthru
          _
        // Predicated region
        $region17: #{tpu_custom_call.1} parent=11 // pred_check
          %p251 = pneg %p100
        $region18: #{tpu_custom_call.1} parent=11 // pred_check_branch
          %253 = sbr.rel (%p251) target = $region20
        $region19: #{tpu_custom_call.1} parent=11 // pred_region
          _
        $region20: #{tpu_custom_call.1} parent=11 // pred_fallthru
          _
        // Predicated region
        $region21: #{tpu_custom_call.1} parent=11 // pred_check
          %p254 = pneg %p121
        $region22: #{tpu_custom_call.1} parent=11 // pred_check_branch
          %256 = sbr.rel (%p254) target = $region24
        $region23: #{tpu_custom_call.1} parent=11 // pred_region
          _
        $region24: #{tpu_custom_call.1} parent=11 // pred_fallthru
          _
        // Predicated region
        $region25: #{tpu_custom_call.1} parent=11 // pred_check
          %p257 = pneg %p142
        $region26: #{tpu_custom_call.1} parent=11 // pred_check_branch
          %259 = sbr.rel (%p257) target = $region28
        $region27: #{tpu_custom_call.1} parent=11 // pred_region
          _
        $region28: #{tpu_custom_call.1} parent=11 // pred_fallthru
          _
        // Predicated region
        $region29: #{tpu_custom_call.1} parent=11 // pred_check
          %p260 = pneg %p163
        $region30: #{tpu_custom_call.1} parent=11 // pred_check_branch
          %262 = sbr.rel (%p260) target = $region32
        $region31: #{tpu_custom_call.1} parent=11 // pred_region
          _
        $region32: #{tpu_custom_call.1} parent=11 // pred_fallthru
          _
        // Predicated region
        $region33: #{tpu_custom_call.1} parent=11 // pred_check
          %p263 = pneg %p184
        $region34: #{tpu_custom_call.1} parent=11 // pred_check_branch
          %265 = sbr.rel (%p263) target = $region36
        $region35: #{tpu_custom_call.1} parent=11 // pred_region
          _
        $region36: #{tpu_custom_call.1} parent=11 // pred_fallthru
          _
        // Predicated region
        $region37: #{tpu_custom_call.1} parent=11 // pred_check
          %p266 = pneg %p205
        $region38: #{tpu_custom_call.1} parent=11 // pred_check_branch
          %268 = sbr.rel (%p266) target = $region40
        $region39: #{tpu_custom_call.1} parent=11 // pred_region
          _
        $region40: #{tpu_custom_call.1} parent=11 // pred_fallthru
          _
      $region12: #{tpu_custom_call.1} parent=5 // pred_fallthru
        _
      %p269 = scmp.lt.s32.totalorder %s18, 2
      // Predicated region
      $region41: #{tpu_custom_call.1} parent=5 // pred_check
        %p270 = pneg %p269
      $region42: #{tpu_custom_call.1} parent=5 // pred_check_branch
        %272 = sbr.rel (%p270) target = $region44
      $region43: #{tpu_custom_call.1} parent=5 // pred_region
        // Predicated region
        $region45: #{tpu_custom_call.1} parent=43 // pred_check
          %p273 = pneg %p52
        $region46: #{tpu_custom_call.1} parent=43 // pred_check_branch
          %275 = sbr.rel (%p273) target = $region48
        $region47: #{tpu_custom_call.1} parent=43 // pred_region
          %p276 = scmp.lt.s32.totalorder %s25, 1
          %s277 = scalar_select %p276, %s25, 1
          %p278 = scmp.lt.s32.totalorder %s26, 0
          %s279 = scalar_select %p278, %s26, 0
          %s280 = smul.addr %s277, 2
          %s281 = sadd.s32 %s279, %s280
          %s282 = smul.addr %s281, 4
          %s283 = scalar_lea.vmem %s0, %s282
        $region48: #{tpu_custom_call.1} parent=43 // pred_fallthru
          _
      $region44: #{tpu_custom_call.1} parent=5 // pred_fallthru
        _
      %p284 = scmp.le.s32.totalorder 1, %s18
      %p285 = scmp.lt.s32.totalorder %s18, 3
      %p286 = pnand %p284, %p285
      %p287 = pneg %p286
      // Predicated region
      $region49: #{tpu_custom_call.1} parent=5 // pred_check
        _
      $region50: #{tpu_custom_call.1} parent=5 // pred_check_branch
        %289 = sbr.rel (%p286) target = $region52
      $region51: #{tpu_custom_call.1} parent=5 // pred_region
        %s290 = ssub.s32 %s18, 1
        %p291 = scmp.lt.s32.totalorder %s27, 1
        %s292 = scalar_select %p291, %s27, 1
        %p293 = scmp.lt.s32.totalorder %s28, 0
        %s294 = scalar_select %p293, %s28, 0
        %s295 = smul.addr %s292, 2
        %s296 = sadd.s32 %s294, %s295
        %s297 = smul.addr %s296, 4
        %s298 = scalar_lea.vmem %s0, %s297
        %p299 = pneg %p58
        %p300 = pneg %p55
        %p301 = pneg %p79
        %p302 = pneg %p76
        %p303 = pneg %p100
        %p304 = pneg %p97
        %p305 = pneg %p121
        %p306 = pneg %p118
        %p307 = pneg %p142
        %p308 = pneg %p139
        %p309 = pneg %p163
        %p310 = pneg %p160
        %p311 = pneg %p184
        %p312 = pneg %p181
        %p313 = pneg %p205
        %p314 = pneg %p202
        %p315 = pneg %p233
        %p316 = pneg %p230
        %s317 = sand.u32 %s220, 1
        %s318 = scalar_lea.sflag [#allocation5], %s317
        %s319 = sand.u32 %s220, 1
        %s320 = scalar_lea.vmem [#allocation4], %s319
        %p321 = scmp.lt.s32.totalorder %s27, 1
        %s322 = scalar_select %p321, %s27, 1
        %p323 = scmp.lt.s32.totalorder %s28, 0
        %s324 = scalar_select %p323, %s28, 0
        %s325 = smul.addr %s322, 2
        %s326 = sadd.s32 %s324, %s325
        %s327 = smul.addr %s326, 4
        %s328 = scalar_lea.vmem %s0, %s327
        %p330 = scmp.eq.s32.totalorder %s28, 0
        // Predicated region
        $region53: #{tpu_custom_call.1} parent=51 // pred_check
          %p331 = pneg %p330
        $region54: #{tpu_custom_call.1} parent=51 // pred_check_branch
          %333 = sbr.rel (%p331) target = $region56
        $region55: #{tpu_custom_call.1} parent=51 // pred_region
          %vm334 = vcmask 19456
          %335 = vst.msk [vmem:[#allocation2] sm:$0xf] %vm334, 0.0
        $region56: #{tpu_custom_call.1} parent=51 // pred_fallthru
          _
        %v336 = vld [vmem:[%s1] sm:$0x3]
        %v337 = vld [vmem:[%s328] sm:$0xf]
        %v338 = vld [vmem:[%s328 + $0x4] sm:$0x7]
        %v341 = vunpack.c.l.b16 %v337
        %v342 = vunpack.c.l.b16 %v338
        %v343 = vpack.c.b16 %v342, %v341
        %vm344 = vcmask 113664
        %v346 = vsel %vm344, %v336, 0
        %vm348 = vcmask 1046528
        %v350 = vsel %vm348, %v343, 0
        %352 = vmatpush.bf16.msra.mxu0 0
        %353 = vmatpush.bf16.msra.mxu0 0
        %354 = vmatpush.bf16.msra.mxu0 0
        %355 = vmatpush.bf16.msra.mxu0 0
        %356 = vmatpush.bf16.msra.mxu0 0
        %357 = vmatpush.bf16.msra.mxu0 0
        %358 = vmatpush.bf16.msra.mxu0 0
        %359 = vmatpush.bf16.msra.mxu0 %v350
        %360 = vmatmul.bf16.gmra.mxu0 %v346
        %v361 = vpop.f32.mrf.mxu0
        %v362 = vadd.f32 0.0, %v361
        %v363 = vpop.f32.mrf.mxu0
        %364 = vdwg.mxu0
        %366 = vrot.lane.b32.xlu0 %v362, 3
        %v367 = vpop.permute.xlu0 %366
        %vm369 = vcmask 150552
        %370 = vst.msk [vmem:[#allocation2] sm:$0xf] %vm369, %v367
        %v371 = vld [vmem:[%s2] sm:$0xff]
        %v372 = vld [vmem:[#allocation2] sm:$0xf]
        %s373 = scalar_lea.vmem %s2, 8
        %v374 = vld [vmem:[%s373] sm:$0xff]
        %376 = vrot.lane.b32.xlu0 %v372, 127
        %v377 = vpop.permute.xlu0 %376
        %vm378 = vcmask 31744
        %v380 = vsel %vm378, %v374, 0
        %vm382 = vcmask 1043456
        %v383 = vsel %vm382, %v377, 0
        %385 = vmatpush.msra.mxu0 0.0
        %386 = vmatpush.msra.mxu0 0.0
        %387 = vmatpush.msra.mxu0 0.0
        %388 = vmatpush.msra.mxu0 0.0
        %389 = vmatpush.msra.mxu0 0.0
        %390 = vmatpush.msra.mxu0 0.0
        %391 = vmatpush.msra.mxu0 0.0
        %392 = vmatpush.msra.mxu0 0.0
        %393 = vmatpush.msra.mxu0 0.0
        %394 = vmatpush.msra.mxu0 0.0
        %395 = vmatpush.msra.mxu0 0.0
        %396 = vmatpush.msra.mxu0 0.0
        %397 = vmatpush.msra.mxu0 0.0
        %398 = vmatpush.msra.mxu0 0.0
        %399 = vmatpush.msra.mxu0 0.0
        %400 = vmatpush.msra.mxu0 %v383
        %401 = vmatmul.f32.gmra.mxu0 %v380
        %v402 = vpop.f32.mrf.mxu0
        %v403 = vadd.f32 0.0, %v402
        %404 = vdwg.mxu0
        %v406 = vsel %vm378, %v371, 0
        %v408 = vsel %vm382, %v372, 0
        %410 = vmatpush.msra.mxu0 0.0
        %411 = vmatpush.msra.mxu0 0.0
        %412 = vmatpush.msra.mxu0 0.0
        %413 = vmatpush.msra.mxu0 0.0
        %414 = vmatpush.msra.mxu0 0.0
        %415 = vmatpush.msra.mxu0 0.0
        %416 = vmatpush.msra.mxu0 0.0
        %417 = vmatpush.msra.mxu0 0.0
        %418 = vmatpush.msra.mxu0 0.0
        %419 = vmatpush.msra.mxu0 0.0
        %420 = vmatpush.msra.mxu0 0.0
        %421 = vmatpush.msra.mxu0 0.0
        %422 = vmatpush.msra.mxu0 0.0
        %423 = vmatpush.msra.mxu0 0.0
        %424 = vmatpush.msra.mxu0 0.0
        %425 = vmatpush.msra.mxu0 %v408
        %426 = vmatmul.f32.gmra.mxu0 %v406
        %v427 = vpop.f32.mrf.mxu0
        %v428 = vadd.f32 %v403, %v427
        %429 = vdwg.mxu0
        %s430 = scalar_lea.vmem %s2, 16
        %v431 = vld [vmem:[%s430] sm:$0xff]
        %432 = vrot.lane.b32.xlu0 %v372, 126
        %v433 = vpop.permute.xlu0 %432
        %v435 = vsel %vm378, %v431, 0
        %v437 = vsel %vm382, %v433, 0
        %439 = vmatpush.msra.mxu0 0.0
        %440 = vmatpush.msra.mxu0 0.0
        %441 = vmatpush.msra.mxu0 0.0
        %442 = vmatpush.msra.mxu0 0.0
        %443 = vmatpush.msra.mxu0 0.0
        %444 = vmatpush.msra.mxu0 0.0
        %445 = vmatpush.msra.mxu0 0.0
        %446 = vmatpush.msra.mxu0 0.0
        %447 = vmatpush.msra.mxu0 0.0
        %448 = vmatpush.msra.mxu0 0.0
        %449 = vmatpush.msra.mxu0 0.0
        %450 = vmatpush.msra.mxu0 0.0
        %451 = vmatpush.msra.mxu0 0.0
        %452 = vmatpush.msra.mxu0 0.0
        %453 = vmatpush.msra.mxu0 0.0
        %454 = vmatpush.msra.mxu0 %v437
        %455 = vmatmul.f32.gmra.mxu0 %v435
        %v456 = vpop.f32.mrf.mxu0
        %v457 = vadd.f32 0.0, %v456
        %458 = vdwg.mxu0
        %v459 = vadd.f32 %v428, %v457
        %s460 = scalar_lea.vmem %s2, 24
        %v461 = vld [vmem:[%s460] sm:$0xff]
        %462 = vrot.lane.b32.xlu0 %v372, 125
        %v463 = vpop.permute.xlu0 %462
        %v465 = vsel %vm378, %v461, 0
        %v467 = vsel %vm382, %v463, 0
        %469 = vmatpush.msra.mxu0 0.0
        %470 = vmatpush.msra.mxu0 0.0
        %471 = vmatpush.msra.mxu0 0.0
        %472 = vmatpush.msra.mxu0 0.0
        %473 = vmatpush.msra.mxu0 0.0
        %474 = vmatpush.msra.mxu0 0.0
        %475 = vmatpush.msra.mxu0 0.0
        %476 = vmatpush.msra.mxu0 0.0
        %477 = vmatpush.msra.mxu0 0.0
        %478 = vmatpush.msra.mxu0 0.0
        %479 = vmatpush.msra.mxu0 0.0
        %480 = vmatpush.msra.mxu0 0.0
        %481 = vmatpush.msra.mxu0 0.0
        %482 = vmatpush.msra.mxu0 0.0
        %483 = vmatpush.msra.mxu0 0.0
        %484 = vmatpush.msra.mxu0 %v467
        %485 = vmatmul.f32.gmra.mxu0 %v465
        %v486 = vpop.f32.mrf.mxu0
        %v487 = vadd.f32 0.0, %v486
        %488 = vdwg.mxu0
        %v489 = vadd.f32 %v459, %v487
        %v490 = vld [vmem:[%s3] sm:$0xff]
        %492 = vset.pattern.permute.xlu0 0
        %493 = vperm.xlu0 %492, %v490
        %v494 = vpop.permute.xlu0 %493
        %v496 = vadd.f32 %v489, %v494
        %vm497 = vcmp.ge.f32.partialorder %v496, 0.0
        %v498 = vmul.f32 %v496, 0.01
        %v499 = vsel %vm497, %v496, %v498
        %v500 = vld [vmem:[%s4] sm:$0xff]
        %v501 = vld [vmem:[%s5] sm:$0xff]
        %503 = vset.pattern.permute.xlu0 0
        %504 = vperm.xlu0 %503, %v501
        %v505 = vpop.permute.xlu0 %504
        %vm507 = vcmask 64512
        %v509 = vsel %vm507, %v500, 0
        %511 = vmatpush.msra.mxu0 0.0
        %512 = vmatpush.msra.mxu0 0.0
        %513 = vmatpush.msra.mxu0 0.0
        %514 = vmatpush.msra.mxu0 0.0
        %515 = vmatpush.msra.mxu0 0.0
        %516 = vmatpush.msra.mxu0 0.0
        %517 = vmatpush.msra.mxu0 0.0
        %518 = vmatpush.msra.mxu0 0.0
        %519 = vmatpush.msra.mxu0 0.0
        %520 = vmatpush.msra.mxu0 0.0
        %521 = vmatpush.msra.mxu0 0.0
        %522 = vmatpush.msra.mxu0 0.0
        %523 = vmatpush.msra.mxu0 0.0
        %524 = vmatpush.msra.mxu0 0.0
        %525 = vmatpush.msra.mxu0 0.0
        %526 = vmatpush.msra.mxu0 %v499
        %527 = vmatmul.f32.gmra.mxu0 %v509
        %v528 = vpop.f32.mrf.mxu0
        %v529 = vadd.f32 %v505, %v528
        %530 = vdwg.mxu0
        %vm531 = vcmp.ge.f32.partialorder %v529, 0.0
        %v532 = vmul.f32 %v529, 0.01
        %v533 = vsel %vm531, %v529, %v532
        %v534 = vld [vmem:[%s6] sm:$0x1]
        %s535 = sld [smem:[#allocation3]]
        %v536 = vstv %s535
        %v538 = vsel %vm507, %v534, 0
        %540 = vmatpush.msra.mxu0 0.0
        %541 = vmatpush.msra.mxu0 0.0
        %542 = vmatpush.msra.mxu0 0.0
        %543 = vmatpush.msra.mxu0 0.0
        %544 = vmatpush.msra.mxu0 0.0
        %545 = vmatpush.msra.mxu0 0.0
        %546 = vmatpush.msra.mxu0 0.0
        %547 = vmatpush.msra.mxu0 0.0
        %548 = vmatpush.msra.mxu0 0.0
        %549 = vmatpush.msra.mxu0 0.0
        %550 = vmatpush.msra.mxu0 0.0
        %551 = vmatpush.msra.mxu0 0.0
        %552 = vmatpush.msra.mxu0 0.0
        %553 = vmatpush.msra.mxu0 0.0
        %554 = vmatpush.msra.mxu0 0.0
        %555 = vmatpush.msra.mxu0 %v533
        %556 = vmatmul.f32.gmra.mxu0 %v538
        %v557 = vpop.f32.mrf.mxu0
        %v558 = vadd.f32 %v536, %v557
        %559 = vdwg.mxu0
        %vm560 = vcmask 122880
        %561 = vst.msk [vmem:[%s320] sm:$0x1] %vm560, %v558
        %s562 = sand.u32 %s220, 1
        %s563 = scalar_lea.sflag [#allocation5], %s562
        %s564 = sand.u32 %s220, 1
        %s565 = scalar_lea.vmem [#allocation4], %s564
        // Predicated region
        $region57: #{tpu_custom_call.1} parent=51 // pred_check
          %p566 = pneg %p230
        $region58: #{tpu_custom_call.1} parent=51 // pred_check_branch
          %568 = sbr.rel (%p566) target = $region60
        $region59: #{tpu_custom_call.1} parent=51 // pred_region
          %570 = vsyncadd %s563, 0
          %s571 = sadd.s32 %s28, %s27
          %s572 = scalar_lea.hbm %s8, %s571
          %s574 = sshll.u32 %s565, 4
          %s575 = int_to_ptr.vmem [resolvable:$true] %s574
          %s576 = sshll.u32 %s572, 4
          %s577 = int_to_ptr.hbm [resolvable:$true] %s576
          %579 = dma.vmem_to_hbm [thread:$0]  %s575, 16, %s577, %s563
        $region60: #{tpu_custom_call.1} parent=51 // pred_fallthru
          _
      $region52: #{tpu_custom_call.1} parent=5 // pred_fallthru
        _
      %p580 = scmp.le.s32.totalorder 2, %s18
      // Predicated region
      $region61: #{tpu_custom_call.1} parent=5 // pred_check
        %p581 = pneg %p580
      $region62: #{tpu_custom_call.1} parent=5 // pred_check_branch
        %583 = sbr.rel (%p581) target = $region64
      $region63: #{tpu_custom_call.1} parent=5 // pred_region
        %s584 = ssub.s32 %s18, 2
        // Predicated region
        $region65: #{tpu_custom_call.1} parent=63 // pred_check
          %p585 = pneg %p236
        $region66: #{tpu_custom_call.1} parent=63 // pred_check_branch
          %587 = sbr.rel (%p585) target = $region68
        $region67: #{tpu_custom_call.1} parent=63 // pred_region
          %s588 = sand.u32 %s221, 1
          %s589 = scalar_lea.sflag [#allocation5], %s588
          %s590 = sand.u32 %s221, 1
          %s591 = scalar_lea.vmem [#allocation4], %s590
          %593 = dma.done %s589, 16
        $region68: #{tpu_custom_call.1} parent=63 // pred_fallthru
          _
      $region64: #{tpu_custom_call.1} parent=5 // pred_fallthru
        _
    $region6: #{tpu_custom_call.1} parent=1 // loop_footer
      %s22 = sadd.s32 1, %s18
    $region7: #{tpu_custom_call.1} parent=1 // loop_footer_branch
      %17 = sbr.rel target = $region3
    $region8: #{tpu_custom_call.1} parent=1 // loop_exit
      _
    %594 = vsyncpa [#allocation5], 1
    %s595 = scalar_lea.sflag [#allocation5], 1
    %596 = vsyncpa %s595, 1

</llo_original>
